<compile_context>
chip_gen: v6e
topology: v6e:2x2x1
jax: 0.10.0
libtpu: 0.0.40
codegen_flags: <defaults>
</compile_context>

<pallas_src>
import functools

import jax
import jax.numpy as jnp
from jax.experimental import pallas as pl
from jax.experimental.pallas import tpu as pltpu

HIDDEN = 256
HEAD_PAD = 128  # fused-head weight lanes, padded to one full lane tile


def dqn_kernel(x_ref,
               w1_ref, b1_ref,
               w2_ref, b2_ref,
               wh_ref, bh_ref,
               out_ref, *, bet_col, out_dim):
    # fc1 + relu  (bf16 operands on the MXU, fp32 accumulate / elementwise).
    # x arrives fp32 from HBM; cast to bf16 in-kernel (VPU slot has slack).
    x = x_ref[...].astype(jnp.bfloat16)
    h = jnp.dot(x, w1_ref[...], preferred_element_type=jnp.float32)
    h = jnp.maximum(h + b1_ref[...], 0.0)
    # fc2 + relu
    h = jnp.dot(h.astype(jnp.bfloat16), w2_ref[...],
                preferred_element_type=jnp.float32)
    h = jnp.maximum(h + b2_ref[...], 0.0)
    # Fused heads: weight columns are [actions | bet | ev | zero-pad] — a
    # single lane-dense MXU push.
    out = jnp.dot(h.astype(jnp.bfloat16), wh_ref[...],
                  preferred_element_type=jnp.float32)
    out = out + bh_ref[...]
    # Drop the zero-pad lanes before the epilogue/store: only out_dim columns
    # are written back to HBM.
    out = out[:, :out_dim]
    # Sigmoid only on the bet column; all other columns pass through.
    col = jax.lax.broadcasted_iota(jnp.int32, out.shape, dimension=1)
    out = jnp.where(col == bet_col, jax.nn.sigmoid(out), out)
    out_ref[...] = out.astype(out_ref.dtype)


def _round_up(n, m):
    return ((n + m - 1) // m) * m


def pack_params(params):
    """One-time packing: fuse the three head linears and cast matmul operands
    to bf16.  Do this ONCE and reuse the result for every forward call."""
    action_size = params["w3"].shape[1]
    out_dim = 2 * action_size + 1
    assert out_dim <= HEAD_PAD

    # Fused head layout is [actions | bet | ev]; the bet column index must
    # match this concat order (see dqn_kernel's bet_col).
    wh = jnp.concatenate([params["w3"], params["w_bet"], params["w_ev"]], axis=1)
    bh = jnp.concatenate([params["b3"], params["b_bet"], params["b_ev"]], axis=1)
    assert wh.shape[1] == out_dim and bh.shape[1] == out_dim
    bet_col = action_size  # column right after the `actions` block

    wh = jnp.pad(wh, ((0, 0), (0, HEAD_PAD - out_dim)))
    bh = jnp.pad(bh, ((0, 0), (0, HEAD_PAD - out_dim)))

    return dict(
        # bf16 matmul operands, fp32 biases (fp32 accumulate inside kernel).
        w1=params["w1"].astype(jnp.bfloat16),
        b1=params["b1"].astype(jnp.float32),
        w2=params["w2"].astype(jnp.bfloat16),
        b2=params["b2"].astype(jnp.float32),
        wh=wh.astype(jnp.bfloat16),
        bh=bh.astype(jnp.float32),
        # static metadata
        action_size=action_size,
        out_dim=out_dim,
        bet_col=bet_col,
    )


def _choose_batch_tile(B):
    """Largest tile <= 1024 that still yields >= 2 grid steps for mid/large
    batches (so v7x's two TensorCores both get work); small batches run as a
    single step."""
    if B <= 16:
        return _round_up(B, 8)
    return min(1024, _round_up((B + 1) // 2, 8))


def dqn_forward(x, packed):
    """x: (B, state_size) fp32.  `packed` comes from pack_params().
    Returns (B, 2*action_size + 1) fp32 = concat([actions, sigmoid(bet), ev])."""
    B, state_size = x.shape
    out_dim = packed["out_dim"]
    bet_col = packed["bet_col"]
    hidden = packed["w1"].shape[1]

    w1, b1 = packed["w1"], packed["b1"]
    w2, b2 = packed["w2"], packed["b2"]
    wh, bh = packed["wh"], packed["bh"]

    # --- Tile only the batch axis; weights resident across grid steps. -----
    tb = _choose_batch_tile(B)
    b_pad = _round_up(B, tb)
    x_in = x if b_pad == B else jnp.pad(x, ((0, b_pad - B), (0, 0)))
    grid = (b_pad // tb,)

    def weight_spec(shape):
        return pl.BlockSpec(shape, lambda i: (0, 0))

    flops = 2 * b_pad * (state_size * hidden + hidden * hidden
                         + hidden * HEAD_PAD)
    bytes_accessed = (
        x_in.size * 4                                     # fp32 x read
        + (w1.size + w2.size + wh.size) * 2               # bf16 weights
        + (b1.size + b2.size + bh.size) * 4               # fp32 biases
        + b_pad * out_dim * 4)                            # fp32 output write

    out = pl.pallas_call(
        functools.partial(dqn_kernel, bet_col=bet_col, out_dim=out_dim),
        out_shape=jax.ShapeDtypeStruct((b_pad, out_dim), jnp.float32),
        grid=grid,
        in_specs=[
            pl.BlockSpec((tb, state_size), lambda i: (i, 0)),  # x: streamed
            weight_spec(w1.shape), weight_spec(b1.shape),      # weights: resident
            weight_spec(w2.shape), weight_spec(b2.shape),
            weight_spec(wh.shape), weight_spec(bh.shape),
        ],
        out_specs=pl.BlockSpec((tb, out_dim), lambda i: (i, 0)),
        compiler_params=pltpu.CompilerParams(
            dimension_semantics=("parallel",)),
        cost_estimate=pl.CostEstimate(
            flops=flops,
            transcendentals=b_pad * out_dim,   # sigmoid on the sliced head
            bytes_accessed=bytes_accessed),
    )(x_in, w1, b1, w2, b2, wh, bh)

    # Only slice if batch padding was actually added.
    return out if b_pad == B else out[:B]


def init_params(key, state_size, action_size, hidden=HIDDEN):
    """Deterministic synthetic init. Weights stored as (in, out)."""
    ks = jax.random.split(key, 10)

    def lin(kw, kb, fan_in, fan_out):
        scale = 1.0 / jnp.sqrt(jnp.float32(fan_in))
        w = jax.random.uniform(kw, (fan_in, fan_out), jnp.float32, -scale, scale)
        b = jax.random.uniform(kb, (1, fan_out), jnp.float32, -scale, scale)
        return w, b

    w1, b1 = lin(ks[0], ks[1], state_size, hidden)
    w2, b2 = lin(ks[2], ks[3], hidden, hidden)
    w3, b3 = lin(ks[4], ks[5], hidden, action_size)
    w_bet, b_bet = lin(ks[6], ks[7], hidden, 1)
    w_ev, b_ev = lin(ks[8], ks[9], hidden, action_size)
    return dict(w1=w1, b1=b1, w2=w2, b2=b2, w3=w3, b3=b3,
                w_bet=w_bet, b_bet=b_bet, w_ev=w_ev, b_ev=b_ev)


def dqn_reference(x, p):
    """Pure-JAX fp32 reference of the PyTorch forward."""
    h = jnp.maximum(x @ p["w1"] + p["b1"], 0.0)
    h = jnp.maximum(h @ p["w2"] + p["b2"], 0.0)
    actions = h @ p["w3"] + p["b3"]
    bet = jax.nn.sigmoid(h @ p["w_bet"] + p["b_bet"])
    ev = h @ p["w_ev"] + p["b_ev"]
    return jnp.concatenate([actions, bet, ev], axis=-1)


if __name__ == "__main__":
    state_size = 32
    action_size = 4
    batch = 8

    key = jax.random.PRNGKey(0)
    k_params, k_x = jax.random.split(key)
    params = init_params(k_params, state_size, action_size)
    x = jax.random.normal(k_x, (batch, state_size), jnp.float32)

    packed = pack_params(params)              # one-time packing / casting
    out = jax.block_until_ready(dqn_forward(x, packed))
    ref = dqn_reference(x, params)

    assert out.shape == (batch, 2 * action_size + 1), out.shape
    # bf16 matmul operands -> loosened tolerance vs. the fp32 reference.
    assert jnp.allclose(out, ref, atol=5e-2, rtol=5e-2), \
        float(jnp.max(jnp.abs(out - ref)))

    print("KERNEL_OK")
</pallas_src>

<mosaic_0001>
module attributes {stable_mosaic.version = 11 : i64} {
  func.func @dqn_kernel(%arg0: i32, %arg1: memref<8x32xf32, #tpu.memory_space<vmem>>, %arg2: memref<32x256xbf16, #tpu.memory_space<vmem>>, %arg3: memref<1x256xf32, #tpu.memory_space<vmem>>, %arg4: memref<256x256xbf16, #tpu.memory_space<vmem>>, %arg5: memref<1x256xf32, #tpu.memory_space<vmem>>, %arg6: memref<256x128xbf16, #tpu.memory_space<vmem>>, %arg7: memref<1x128xf32, #tpu.memory_space<vmem>>, %arg8: memref<8x9xf32, #tpu.memory_space<vmem>>) attributes {dimension_semantics = [#tpu.dimension_semantics<parallel>], iteration_bounds = array<i64: 1>, scalar_prefetch = 0 : i64, scratch_operands = 0 : i64, tpu.core_type = #tpu.core_type<tc>, window_params = [{transform_indices = @transform_0, window_bounds = array<i64: 8, 32>}, {pipeline_mode = #tpu.pipeline_mode<synchronous>, transform_indices = @transform_1, window_bounds = array<i64: 32, 256>}, {pipeline_mode = #tpu.pipeline_mode<synchronous>, transform_indices = @transform_2, window_bounds = array<i64: 1, 256>}, {pipeline_mode = #tpu.pipeline_mode<synchronous>, transform_indices = @transform_3, window_bounds = array<i64: 256, 256>}, {pipeline_mode = #tpu.pipeline_mode<synchronous>, transform_indices = @transform_4, window_bounds = array<i64: 1, 256>}, {pipeline_mode = #tpu.pipeline_mode<synchronous>, transform_indices = @transform_5, window_bounds = array<i64: 256, 128>}, {pipeline_mode = #tpu.pipeline_mode<synchronous>, transform_indices = @transform_6, window_bounds = array<i64: 1, 128>}, {transform_indices = @transform_7, window_bounds = array<i64: 8, 9>}]} {
    %c0 = arith.constant 0 : index
    %c0_0 = arith.constant 0 : index
    %0 = vector.load %arg1[%c0, %c0_0] : memref<8x32xf32, #tpu.memory_space<vmem>>, vector<8x32xf32>
    %1 = arith.truncf %0 : vector<8x32xf32> to vector<8x32xbf16>
    %c0_1 = arith.constant 0 : index
    %c0_2 = arith.constant 0 : index
    %2 = vector.load %arg2[%c0_1, %c0_2] : memref<32x256xbf16, #tpu.memory_space<vmem>>, vector<32x256xbf16>
    %cst = arith.constant dense<0.000000e+00> : vector<8x256xf32>
    %3 = tpu.matmul %1, %2, %cst {dimension_numbers = #tpu.dot_dimension_numbers<[1], [0], [0], [1], [0, 0, 1, 1], [], []>} : vector<8x32xbf16>, vector<32x256xbf16>, vector<8x256xf32> -> vector<8x256xf32>
    %c0_3 = arith.constant 0 : index
    %c0_4 = arith.constant 0 : index
    %4 = vector.load %arg3[%c0_3, %c0_4] : memref<1x256xf32, #tpu.memory_space<vmem>>, vector<1x256xf32>
    %5 = vector.broadcast %4 : vector<1x256xf32> to vector<8x256xf32>
    %6 = arith.addf %3, %5 : vector<8x256xf32>
    %cst_5 = arith.constant 0.000000e+00 : f32
    %7 = vector.broadcast %cst_5 : f32 to vector<8x256xf32>
    %8 = arith.maximumf %6, %7 : vector<8x256xf32>
    %9 = arith.truncf %8 : vector<8x256xf32> to vector<8x256xbf16>
    %c0_6 = arith.constant 0 : index
    %c0_7 = arith.constant 0 : index
    %10 = vector.load %arg4[%c0_6, %c0_7] : memref<256x256xbf16, #tpu.memory_space<vmem>>, vector<256x256xbf16>
    %cst_8 = arith.constant dense<0.000000e+00> : vector<8x256xf32>
    %11 = tpu.matmul %9, %10, %cst_8 {dimension_numbers = #tpu.dot_dimension_numbers<[1], [0], [0], [1], [0, 0, 1, 1], [], []>} : vector<8x256xbf16>, vector<256x256xbf16>, vector<8x256xf32> -> vector<8x256xf32>
    %c0_9 = arith.constant 0 : index
    %c0_10 = arith.constant 0 : index
    %12 = vector.load %arg5[%c0_9, %c0_10] : memref<1x256xf32, #tpu.memory_space<vmem>>, vector<1x256xf32>
    %13 = vector.broadcast %12 : vector<1x256xf32> to vector<8x256xf32>
    %14 = arith.addf %11, %13 : vector<8x256xf32>
    %cst_11 = arith.constant 0.000000e+00 : f32
    %15 = vector.broadcast %cst_11 : f32 to vector<8x256xf32>
    %16 = arith.maximumf %14, %15 : vector<8x256xf32>
    %17 = arith.truncf %16 : vector<8x256xf32> to vector<8x256xbf16>
    %c0_12 = arith.constant 0 : index
    %c0_13 = arith.constant 0 : index
    %18 = vector.load %arg6[%c0_12, %c0_13] : memref<256x128xbf16, #tpu.memory_space<vmem>>, vector<256x128xbf16>
    %cst_14 = arith.constant dense<0.000000e+00> : vector<8x128xf32>
    %19 = tpu.matmul %17, %18, %cst_14 {dimension_numbers = #tpu.dot_dimension_numbers<[1], [0], [0], [1], [0, 0, 1, 1], [], []>} : vector<8x256xbf16>, vector<256x128xbf16>, vector<8x128xf32> -> vector<8x128xf32>
    %c0_15 = arith.constant 0 : index
    %c0_16 = arith.constant 0 : index
    %20 = vector.load %arg7[%c0_15, %c0_16] : memref<1x128xf32, #tpu.memory_space<vmem>>, vector<1x128xf32>
    %21 = vector.broadcast %20 : vector<1x128xf32> to vector<8x128xf32>
    %22 = arith.addf %19, %21 : vector<8x128xf32>
    %23 = vector.extract_strided_slice %22 {offsets = [0, 0], sizes = [8, 9], strides = [1, 1]} : vector<8x128xf32> to vector<8x9xf32>
    %24 = tpu.iota {dimensions = array<i32: 1>} : vector<8x9xi32>
    %c4_i32 = arith.constant 4 : i32
    %25 = vector.broadcast %c4_i32 : i32 to vector<8x9xi32>
    %26 = arith.cmpi eq, %24, %25 : vector<8x9xi32>
    %27 = arith.negf %23 : vector<8x9xf32>
    %28 = math.exp %27 : vector<8x9xf32>
    %cst_17 = arith.constant 1.000000e+00 : f32
    %29 = vector.broadcast %cst_17 : f32 to vector<8x9xf32>
    %30 = arith.addf %29, %28 : vector<8x9xf32>
    %31 = arith.divf %29, %30 : vector<8x9xf32>
    %32 = arith.select %26, %31, %23 : vector<8x9xi1>, vector<8x9xf32>
    %c0_18 = arith.constant 0 : index
    %c0_19 = arith.constant 0 : index
    %33 = vector.load %arg8[%c0_18, %c0_19] : memref<8x9xf32, #tpu.memory_space<vmem>>, vector<8x9xf32>
    tpu.vector_store %arg8[%c0_18, %c0_19], %32 {strides = array<i32>} : memref<8x9xf32, #tpu.memory_space<vmem>>, vector<8x9xf32>,
    return
  }
  func.func @transform_0(%arg0: i32) -> (i32, i32) {
    %c0_i32 = arith.constant 0 : i32
    %c0_i32_0 = arith.constant 0 : i32
    return %arg0, %c0_i32 : i32, i32
  }
  func.func @transform_1(%arg0: i32) -> (i32, i32) {
    %c0_i32 = arith.constant 0 : i32
    %c0_i32_0 = arith.constant 0 : i32
    %c0_i32_1 = arith.constant 0 : i32
    return %c0_i32, %c0_i32_0 : i32, i32
  }
  func.func @transform_2(%arg0: i32) -> (i32, i32) {
    %c0_i32 = arith.constant 0 : i32
    %c0_i32_0 = arith.constant 0 : i32
    %c0_i32_1 = arith.constant 0 : i32
    return %c0_i32, %c0_i32_0 : i32, i32
  }
  func.func @transform_3(%arg0: i32) -> (i32, i32) {
    %c0_i32 = arith.constant 0 : i32
    %c0_i32_0 = arith.constant 0 : i32
    %c0_i32_1 = arith.constant 0 : i32
    return %c0_i32, %c0_i32_0 : i32, i32
  }
  func.func @transform_4(%arg0: i32) -> (i32, i32) {
    %c0_i32 = arith.constant 0 : i32
    %c0_i32_0 = arith.constant 0 : i32
    %c0_i32_1 = arith.constant 0 : i32
    return %c0_i32, %c0_i32_0 : i32, i32
  }
  func.func @transform_5(%arg0: i32) -> (i32, i32) {
    %c0_i32 = arith.constant 0 : i32
    %c0_i32_0 = arith.constant 0 : i32
    %c0_i32_1 = arith.constant 0 : i32
    return %c0_i32, %c0_i32_0 : i32, i32
  }
  func.func @transform_6(%arg0: i32) -> (i32, i32) {
    %c0_i32 = arith.constant 0 : i32
    %c0_i32_0 = arith.constant 0 : i32
    %c0_i32_1 = arith.constant 0 : i32
    return %c0_i32, %c0_i32_0 : i32, i32
  }
  func.func @transform_7(%arg0: i32) -> (i32, i32) {
    %c0_i32 = arith.constant 0 : i32
    %c0_i32_0 = arith.constant 0 : i32
    return %arg0, %c0_i32 : i32, i32
  }
}

</mosaic_0001>

<llo_original>
// kernel: tpu_custom_call.1
$region0: #{tpu_custom_call.1}
  #allocation0 [shape = 'u32[]', space=smem, size = 0x4, offset = 0x4, fixed_abs, tag = 'smem constant byte address 0x4 - core index']
  #allocation1 [shape = 'u32[144,128]{1,0:T(1,128)}', space=vmem, size = 0x12000, scoped, tag = 'internal scratch']
  %s0 = inlined_call_operand.hbm [shape: f32[8,32], index: 0, kind: input, shape index: {}]
  %s1 = inlined_call_operand.hbm [shape: bf16[32,256], index: 1, kind: input, shape index: {}]
  %s2 = inlined_call_operand.vmem [shape: f32[1,256], index: 2, kind: input, shape index: {}]
  %s3 = inlined_call_operand.hbm [shape: bf16[256,256], index: 3, kind: input, shape index: {}]
  %s4 = inlined_call_operand.vmem [shape: f32[1,256], index: 4, kind: input, shape index: {}]
  %s5 = inlined_call_operand.hbm [shape: bf16[256,128], index: 5, kind: input, shape index: {}]
  %s6 = inlined_call_operand.vmem [shape: f32[1,128], index: 6, kind: input, shape index: {}]
  %s7 = inlined_call_operand.hbm [shape: f32[8,9], index: 7, kind: output, shape index: {}]
  %s8 = sld [smem:[#allocation0]]
  $region54: #{tpu_custom_call.1} parent=0
    _
  %s10 = ssub.s32 1, %s8
  %s11 = scalar_select 0, %s10, %s8
  $region1: #{tpu_custom_call.1} parent=0
    #allocation2 [shape = 'u8[4096]{0}', space=vmem, size = 0x1000, scoped, tag = 'input window, operand 0, single buffered']
    #allocation3 [shape = 's32[1]{0}', space=sflag, size = 0x4, scoped, tag = 'scoped memory for tpu_custom_call.1']
    #allocation4 [shape = 's32[1]{0}', space=sflag, size = 0x4, scoped, tag = 'scoped memory for tpu_custom_call.1']
    #allocation5 [shape = 'u8[16384]{0}', space=vmem, size = 0x4000, scoped, tag = 'input window, operand 1, single buffered']
    #allocation6 [shape = 's32[1]{0}', space=sflag, size = 0x4, scoped, tag = 'scoped memory for tpu_custom_call.1']
    #allocation7 [shape = 'u8[131072]{0}', space=vmem, size = 0x20000, scoped, tag = 'input window, operand 3, single buffered']
    #allocation8 [shape = 'u8[65536]{0}', space=vmem, size = 0x10000, scoped, tag = 'input window, operand 5, single buffered']
    #allocation9 [shape = 's32[1]{0}', space=sflag, size = 0x4, scoped, tag = 'scoped memory for tpu_custom_call.1']
    #allocation10 [shape = 'u8[4096]{0}', space=vmem, size = 0x1000, scoped, tag = 'output window, operand 0, single buffered']
    %12 = vsyncpa [#allocation3], 0
    %13 = vsyncpa [#allocation6], 0
    %14 = vsyncpa [#allocation9], 0
    %15 = vsyncpa [#allocation4], 0
    // Predicated region
    $region2: #{tpu_custom_call.1} parent=1 // pred_check
      _
    $region3: #{tpu_custom_call.1} parent=1 // pred_check_branch
      %17 = sbr.rel (0) target = $region5
    $region4: #{tpu_custom_call.1} parent=1 // pred_region
      %s19 = ssub.s32 128, 128
      %20 = vsyncadd [#allocation3], %s19
      %s22 = sshll.u32 [#allocation2], 4
      %s23 = int_to_ptr.vmem [resolvable:$true] %s22
      %25 = dma.hbm_to_vmem [thread:$0]  %s0, 128, %s23, [#allocation3]
    $region5: #{tpu_custom_call.1} parent=1 // pred_fallthru
      _
    // Predicated region
    $region6: #{tpu_custom_call.1} parent=1 // pred_check
      _
    $region7: #{tpu_custom_call.1} parent=1 // pred_check_branch
      %27 = sbr.rel (0) target = $region9
    $region8: #{tpu_custom_call.1} parent=1 // pred_region
      %s29 = ssub.s32 512, 512
      %30 = vsyncadd [#allocation6], %s29
      %s31 = sshll.u32 [#allocation5], 4
      %s32 = int_to_ptr.vmem [resolvable:$true] %s31
      %37 = dma.hbm_to_vmem [thread:$0]  %s1, 512, %s32, [#allocation6], 128, 128, 8
    $region9: #{tpu_custom_call.1} parent=1 // pred_fallthru
      _
    // Predicated region
    $region10: #{tpu_custom_call.1} parent=1 // pred_check
      _
    $region11: #{tpu_custom_call.1} parent=1 // pred_check_branch
      %39 = sbr.rel (0) target = $region13
    $region12: #{tpu_custom_call.1} parent=1 // pred_region
      _
    $region13: #{tpu_custom_call.1} parent=1 // pred_fallthru
      _
    // Predicated region
    $region14: #{tpu_custom_call.1} parent=1 // pred_check
      _
    $region15: #{tpu_custom_call.1} parent=1 // pred_check_branch
      %41 = sbr.rel (0) target = $region17
    $region16: #{tpu_custom_call.1} parent=1 // pred_region
      %s43 = ssub.s32 4096, 4096
      %44 = vsyncadd [#allocation6], %s43
      %s45 = sshll.u32 [#allocation7], 4
      %s46 = int_to_ptr.vmem [resolvable:$true] %s45
      %51 = dma.hbm_to_vmem [thread:$0]  %s3, 4096, %s46, [#allocation6], 128, 128, 8
    $region17: #{tpu_custom_call.1} parent=1 // pred_fallthru
      _
    // Predicated region
    $region18: #{tpu_custom_call.1} parent=1 // pred_check
      _
    $region19: #{tpu_custom_call.1} parent=1 // pred_check_branch
      %53 = sbr.rel (0) target = $region21
    $region20: #{tpu_custom_call.1} parent=1 // pred_region
      _
    $region21: #{tpu_custom_call.1} parent=1 // pred_fallthru
      _
    // Predicated region
    $region22: #{tpu_custom_call.1} parent=1 // pred_check
      _
    $region23: #{tpu_custom_call.1} parent=1 // pred_check_branch
      %55 = sbr.rel (0) target = $region25
    $region24: #{tpu_custom_call.1} parent=1 // pred_region
      %s57 = ssub.s32 2048, 2048
      %58 = vsyncadd [#allocation9], %s57
      %s59 = sshll.u32 [#allocation8], 4
      %s60 = int_to_ptr.vmem [resolvable:$true] %s59
      %65 = dma.hbm_to_vmem [thread:$0]  %s5, 2048, %s60, [#allocation9], 64, 64, 4
    $region25: #{tpu_custom_call.1} parent=1 // pred_fallthru
      _
    // Predicated region
    $region26: #{tpu_custom_call.1} parent=1 // pred_check
      _
    $region27: #{tpu_custom_call.1} parent=1 // pred_check_branch
      %67 = sbr.rel (0) target = $region29
    $region28: #{tpu_custom_call.1} parent=1 // pred_region
      _
    $region29: #{tpu_custom_call.1} parent=1 // pred_fallthru
      _
    // Predicated region
    $region30: #{tpu_custom_call.1} parent=1 // pred_check
      _
    $region31: #{tpu_custom_call.1} parent=1 // pred_check_branch
      %69 = sbr.rel (0) target = $region33
    $region32: #{tpu_custom_call.1} parent=1 // pred_region
      %70 = dma.done [#allocation3], 128
    $region33: #{tpu_custom_call.1} parent=1 // pred_fallthru
      _
    // Predicated region
    $region34: #{tpu_custom_call.1} parent=1 // pred_check
      _
    $region35: #{tpu_custom_call.1} parent=1 // pred_check_branch
      %72 = sbr.rel (0) target = $region37
    $region36: #{tpu_custom_call.1} parent=1 // pred_region
      %73 = dma.done [#allocation6], 512
    $region37: #{tpu_custom_call.1} parent=1 // pred_fallthru
      _
    // Predicated region
    $region38: #{tpu_custom_call.1} parent=1 // pred_check
      _
    $region39: #{tpu_custom_call.1} parent=1 // pred_check_branch
      %75 = sbr.rel (0) target = $region41
    $region40: #{tpu_custom_call.1} parent=1 // pred_region
      %76 = dma.done [#allocation6], 4096
    $region41: #{tpu_custom_call.1} parent=1 // pred_fallthru
      _
    // Predicated region
    $region42: #{tpu_custom_call.1} parent=1 // pred_check
      _
    $region43: #{tpu_custom_call.1} parent=1 // pred_check_branch
      %78 = sbr.rel (0) target = $region45
    $region44: #{tpu_custom_call.1} parent=1 // pred_region
      %79 = dma.done [#allocation9], 2048
    $region45: #{tpu_custom_call.1} parent=1 // pred_fallthru
      _
    %v81 = vld [vmem:[#allocation2] sm:$0xff]
    %v82 = vpack.c.bf16 %v81, %v81
    %v83 = vld [vmem:[#allocation5] sm:$0xff]
    %v84 = vld [vmem:[#allocation5 + $0x8] sm:$0xff]
    %v85 = vld [vmem:[#allocation5 + $0x10] sm:$0xff]
    %v86 = vld [vmem:[#allocation5 + $0x18] sm:$0xff]
    %v87 = vld [vmem:[%s2] sm:$0x3]
    %v89 = vlaneseq
    %v90 = vshrl.u32 %v89, 7
    %v91 = vsub.s32 0, %v90
    %v92 = vrot.slane %v87, %v91
    %v93 = vlaneseq
    %v94 = vshrl.u32 %v93, 7
    %v95 = vsub.s32 1, %v94
    %v96 = vrot.slane %v87, %v95
    %v103 = vunpack.c.l.b16 %v83
    %v104 = vunpack.c.h.b16 %v83
    %v105 = vunpack.c.l.b16 %v84
    %v106 = vunpack.c.h.b16 %v84
    %v107 = vunpack.c.l.b16 %v85
    %v108 = vunpack.c.h.b16 %v85
    %v109 = vunpack.c.l.b16 %v86
    %v110 = vunpack.c.h.b16 %v86
    %v111 = vpack.c.b16 %v105, %v103
    %v112 = vpack.c.b16 %v106, %v104
    %v113 = vpack.c.b16 %v109, %v107
    %v114 = vpack.c.b16 %v110, %v108
    %vm119 = vcmask 261120
    %v121 = vsel %vm119, %v82, 0
    %123 = vmatprep.subr.bf16.mxu0 0
    %124 = vmatpush1.bf16.msra.mxu0 0
    %125 = vmatprep.subr.bf16.mxu0 0
    %126 = vmatpush1.bf16.msra.mxu0 0
    %127 = vmatprep.subr.bf16.mxu0 0
    %128 = vmatpush1.bf16.msra.mxu0 0
    %129 = vmatprep.subr.bf16.mxu0 0
    %130 = vmatpush1.bf16.msra.mxu0 0
    %131 = vmatprep.subr.bf16.mxu0 0
    %132 = vmatpush1.bf16.msra.mxu0 0
    %133 = vmatprep.subr.bf16.mxu0 0
    %134 = vmatpush1.bf16.msra.mxu0 0
    %135 = vmatprep.subr.bf16.mxu0 %v114
    %136 = vmatpush1.bf16.msra.mxu0 %v113
    %137 = vmatprep.subr.bf16.mxu0 %v112
    %138 = vmatpush1.bf16.msra.mxu0 %v111
    %139 = vmatprep.subr.bf16.mxu0 0
    %140 = vmatpush2.bf16.msra.mxu0 0
    %141 = vmatprep.subr.bf16.mxu0 0
    %142 = vmatpush2.bf16.msra.mxu0 0
    %143 = vmatprep.subr.bf16.mxu0 0
    %144 = vmatpush2.bf16.msra.mxu0 0
    %145 = vmatprep.subr.bf16.mxu0 0
    %146 = vmatpush2.bf16.msra.mxu0 0
    %147 = vmatprep.subr.bf16.mxu0 0
    %148 = vmatpush2.bf16.msra.mxu0 0
    %149 = vmatprep.subr.bf16.mxu0 0
    %150 = vmatpush2.bf16.msra.mxu0 0
    %151 = vmatprep.subr.bf16.mxu0 0
    %152 = vmatpush2.bf16.msra.mxu0 0
    %153 = vmatprep.subr.bf16.mxu0 0
    %154 = vmatpush2.bf16.msra.mxu0 0
    %155 = vmatprep.mubr.bf16.mxu0 0
    %156 = vmatmul.mubr.bf16.gmra.mxu0 %v121
    %v157 = vpop.f32.mrf.mxu0
    %v158 = vadd.f32 %v92, %v157
    %v159 = vpop.f32.mrf.mxu0
    %v160 = vadd.f32 %v96, %v159
    %v161 = vpop.f32.mrf.mxu0
    %v162 = vpop.f32.mrf.mxu0
    %163 = vdwg.mxu0
    %v164 = vmax.f32 %v158, 0.0
    %v165 = vmax.f32 %v160, 0.0
    %v166 = vpack.c.bf16 %v164, %v164
    %v167 = vpack.c.bf16 %v165, %v165
    %v168 = vld [vmem:[#allocation7] sm:$0xff]
    %v169 = vld [vmem:[#allocation7 + $0x8] sm:$0xff]
    %v170 = vld [vmem:[#allocation7 + $0x10] sm:$0xff]
    %v171 = vld [vmem:[#allocation7 + $0x18] sm:$0xff]
    %v172 = vld [vmem:[#allocation7 + $0x20] sm:$0xff]
    %v173 = vld [vmem:[#allocation7 + $0x28] sm:$0xff]
    %v174 = vld [vmem:[#allocation7 + $0x30] sm:$0xff]
    %v175 = vld [vmem:[#allocation7 + $0x38] sm:$0xff]
    %v176 = vld [vmem:[#allocation7 + $0x40] sm:$0xff]
    %v177 = vld [vmem:[#allocation7 + $0x48] sm:$0xff]
    %v178 = vld [vmem:[#allocation7 + $0x50] sm:$0xff]
    %v179 = vld [vmem:[#allocation7 + $0x58] sm:$0xff]
    %v180 = vld [vmem:[#allocation7 + $0x60] sm:$0xff]
    %v181 = vld [vmem:[#allocation7 + $0x68] sm:$0xff]
    %v182 = vld [vmem:[#allocation7 + $0x70] sm:$0xff]
    %v183 = vld [vmem:[#allocation7 + $0x78] sm:$0xff]
    %v184 = vld [vmem:[#allocation7 + $0x80] sm:$0xff]
    %v185 = vld [vmem:[#allocation7 + $0x88] sm:$0xff]
    %v186 = vld [vmem:[#allocation7 + $0x90] sm:$0xff]
    %v187 = vld [vmem:[#allocation7 + $0x98] sm:$0xff]
    %v188 = vld [vmem:[#allocation7 + $0xa0] sm:$0xff]
    %v189 = vld [vmem:[#allocation7 + $0xa8] sm:$0xff]
    %v190 = vld [vmem:[#allocation7 + $0xb0] sm:$0xff]
    %v191 = vld [vmem:[#allocation7 + $0xb8] sm:$0xff]
    %v192 = vld [vmem:[#allocation7 + $0xc0] sm:$0xff]
    %v193 = vld [vmem:[#allocation7 + $0xc8] sm:$0xff]
    %v194 = vld [vmem:[#allocation7 + $0xd0] sm:$0xff]
    %v195 = vld [vmem:[#allocation7 + $0xd8] sm:$0xff]
    %v196 = vld [vmem:[#allocation7 + $0xe0] sm:$0xff]
    %v197 = vld [vmem:[#allocation7 + $0xe8] sm:$0xff]
    %v198 = vld [vmem:[#allocation7 + $0xf0] sm:$0xff]
    %v199 = vld [vmem:[#allocation7 + $0xf8] sm:$0xff]
    %v200 = vld [vmem:[%s4] sm:$0x3]
    %v202 = vlaneseq
    %v203 = vshrl.u32 %v202, 7
    %v204 = vsub.s32 0, %v203
    %v205 = vrot.slane %v200, %v204
    %v206 = vlaneseq
    %v207 = vshrl.u32 %v206, 7
    %v208 = vsub.s32 1, %v207
    %v209 = vrot.slane %v200, %v208
    %v244 = vunpack.c.l.b16 %v168
    %v245 = vunpack.c.h.b16 %v168
    %v246 = vunpack.c.l.b16 %v169
    %v247 = vunpack.c.h.b16 %v169
    %v248 = vunpack.c.l.b16 %v170
    %v249 = vunpack.c.h.b16 %v170
    %v250 = vunpack.c.l.b16 %v171
    %v251 = vunpack.c.h.b16 %v171
    %v252 = vunpack.c.l.b16 %v172
    %v253 = vunpack.c.h.b16 %v172
    %v254 = vunpack.c.l.b16 %v173
    %v255 = vunpack.c.h.b16 %v173
    %v256 = vunpack.c.l.b16 %v174
    %v257 = vunpack.c.h.b16 %v174
    %v258 = vunpack.c.l.b16 %v175
    %v259 = vunpack.c.h.b16 %v175
    %v260 = vunpack.c.l.b16 %v176
    %v261 = vunpack.c.h.b16 %v176
    %v262 = vunpack.c.l.b16 %v177
    %v263 = vunpack.c.h.b16 %v177
    %v264 = vunpack.c.l.b16 %v178
    %v265 = vunpack.c.h.b16 %v178
    %v266 = vunpack.c.l.b16 %v179
    %v267 = vunpack.c.h.b16 %v179
    %v268 = vunpack.c.l.b16 %v180
    %v269 = vunpack.c.h.b16 %v180
    %v270 = vunpack.c.l.b16 %v181
    %v271 = vunpack.c.h.b16 %v181
    %v272 = vunpack.c.l.b16 %v182
    %v273 = vunpack.c.h.b16 %v182
    %v274 = vunpack.c.l.b16 %v183
    %v275 = vunpack.c.h.b16 %v183
    %v276 = vunpack.c.l.b16 %v184
    %v277 = vunpack.c.h.b16 %v184
    %v278 = vunpack.c.l.b16 %v185
    %v279 = vunpack.c.h.b16 %v185
    %v280 = vunpack.c.l.b16 %v186
    %v281 = vunpack.c.h.b16 %v186
    %v282 = vunpack.c.l.b16 %v187
    %v283 = vunpack.c.h.b16 %v187
    %v284 = vunpack.c.l.b16 %v188
    %v285 = vunpack.c.h.b16 %v188
    %v286 = vunpack.c.l.b16 %v189
    %v287 = vunpack.c.h.b16 %v189
    %v288 = vunpack.c.l.b16 %v190
    %v289 = vunpack.c.h.b16 %v190
    %v290 = vunpack.c.l.b16 %v191
    %v291 = vunpack.c.h.b16 %v191
    %v292 = vunpack.c.l.b16 %v192
    %v293 = vunpack.c.h.b16 %v192
    %v294 = vunpack.c.l.b16 %v193
    %v295 = vunpack.c.h.b16 %v193
    %v296 = vunpack.c.l.b16 %v194
    %v297 = vunpack.c.h.b16 %v194
    %v298 = vunpack.c.l.b16 %v195
    %v299 = vunpack.c.h.b16 %v195
    %v300 = vunpack.c.l.b16 %v196
    %v301 = vunpack.c.h.b16 %v196
    %v302 = vunpack.c.l.b16 %v197
    %v303 = vunpack.c.h.b16 %v197
    %v304 = vunpack.c.l.b16 %v198
    %v305 = vunpack.c.h.b16 %v198
    %v306 = vunpack.c.l.b16 %v199
    %v307 = vunpack.c.h.b16 %v199
    %v308 = vpack.c.b16 %v246, %v244
    %v309 = vpack.c.b16 %v247, %v245
    %v310 = vpack.c.b16 %v250, %v248
    %v311 = vpack.c.b16 %v251, %v249
    %v312 = vpack.c.b16 %v254, %v252
    %v313 = vpack.c.b16 %v255, %v253
    %v314 = vpack.c.b16 %v258, %v256
    %v315 = vpack.c.b16 %v259, %v257
    %v316 = vpack.c.b16 %v262, %v260
    %v317 = vpack.c.b16 %v263, %v261
    %v318 = vpack.c.b16 %v266, %v264
    %v319 = vpack.c.b16 %v267, %v265
    %v320 = vpack.c.b16 %v270, %v268
    %v321 = vpack.c.b16 %v271, %v269
    %v322 = vpack.c.b16 %v274, %v272
    %v323 = vpack.c.b16 %v275, %v273
    %v324 = vpack.c.b16 %v278, %v276
    %v325 = vpack.c.b16 %v279, %v277
    %v326 = vpack.c.b16 %v282, %v280
    %v327 = vpack.c.b16 %v283, %v281
    %v328 = vpack.c.b16 %v286, %v284
    %v329 = vpack.c.b16 %v287, %v285
    %v330 = vpack.c.b16 %v290, %v288
    %v331 = vpack.c.b16 %v291, %v289
    %v332 = vpack.c.b16 %v294, %v292
    %v333 = vpack.c.b16 %v295, %v293
    %v334 = vpack.c.b16 %v298, %v296
    %v335 = vpack.c.b16 %v299, %v297
    %v336 = vpack.c.b16 %v302, %v300
    %v337 = vpack.c.b16 %v303, %v301
    %v338 = vpack.c.b16 %v306, %v304
    %v339 = vpack.c.b16 %v307, %v305
    %372 = vmatprep.subr.bf16.mxu0 %v323
    %373 = vmatpush1.bf16.msra.mxu0 %v322
    %374 = vmatprep.subr.bf16.mxu0 %v321
    %375 = vmatpush1.bf16.msra.mxu0 %v320
    %376 = vmatprep.subr.bf16.mxu0 %v319
    %377 = vmatpush1.bf16.msra.mxu0 %v318
    %378 = vmatprep.subr.bf16.mxu0 %v317
    %379 = vmatpush1.bf16.msra.mxu0 %v316
    %380 = vmatprep.subr.bf16.mxu0 %v315
    %381 = vmatpush1.bf16.msra.mxu0 %v314
    %382 = vmatprep.subr.bf16.mxu0 %v313
    %383 = vmatpush1.bf16.msra.mxu0 %v312
    %384 = vmatprep.subr.bf16.mxu0 %v311
    %385 = vmatpush1.bf16.msra.mxu0 %v310
    %386 = vmatprep.subr.bf16.mxu0 %v309
    %387 = vmatpush1.bf16.msra.mxu0 %v308
    %388 = vmatprep.subr.bf16.mxu0 %v339
    %389 = vmatpush2.bf16.msra.mxu0 %v338
    %390 = vmatprep.subr.bf16.mxu0 %v337
    %391 = vmatpush2.bf16.msra.mxu0 %v336
    %392 = vmatprep.subr.bf16.mxu0 %v335
    %393 = vmatpush2.bf16.msra.mxu0 %v334
    %394 = vmatprep.subr.bf16.mxu0 %v333
    %395 = vmatpush2.bf16.msra.mxu0 %v332
    %396 = vmatprep.subr.bf16.mxu0 %v331
    %397 = vmatpush2.bf16.msra.mxu0 %v330
    %398 = vmatprep.subr.bf16.mxu0 %v329
    %399 = vmatpush2.bf16.msra.mxu0 %v328
    %400 = vmatprep.subr.bf16.mxu0 %v327
    %401 = vmatpush2.bf16.msra.mxu0 %v326
    %402 = vmatprep.subr.bf16.mxu0 %v325
    %403 = vmatpush2.bf16.msra.mxu0 %v324
    %404 = vmatprep.mubr.bf16.mxu0 %v167
    %405 = vmatmul.mubr.bf16.gmra.mxu0 %v166
    %v406 = vpop.f32.mrf.mxu0
    %v407 = vadd.f32 %v205, %v406
    %v408 = vpop.f32.mrf.mxu0
    %v409 = vadd.f32 %v209, %v408
    %v410 = vpop.f32.mrf.mxu0
    %v411 = vpop.f32.mrf.mxu0
    %412 = vdwg.mxu0
    %v413 = vmax.f32 %v407, 0.0
    %v414 = vmax.f32 %v409, 0.0
    %v415 = vpack.c.bf16 %v413, %v413
    %v416 = vpack.c.bf16 %v414, %v414
    %v417 = vld [vmem:[#allocation8] sm:$0xf]
    %v418 = vld [vmem:[#allocation8 + $0x4] sm:$0xf]
    %v419 = vld [vmem:[#allocation8 + $0x8] sm:$0xf]
    %v420 = vld [vmem:[#allocation8 + $0xc] sm:$0xf]
    %v421 = vld [vmem:[#allocation8 + $0x10] sm:$0xf]
    %v422 = vld [vmem:[#allocation8 + $0x14] sm:$0xf]
    %v423 = vld [vmem:[#allocation8 + $0x18] sm:$0xf]
    %v424 = vld [vmem:[#allocation8 + $0x1c] sm:$0xf]
    %v425 = vld [vmem:[#allocation8 + $0x20] sm:$0xf]
    %v426 = vld [vmem:[#allocation8 + $0x24] sm:$0xf]
    %v427 = vld [vmem:[#allocation8 + $0x28] sm:$0xf]
    %v428 = vld [vmem:[#allocation8 + $0x2c] sm:$0xf]
    %v429 = vld [vmem:[#allocation8 + $0x30] sm:$0xf]
    %v430 = vld [vmem:[#allocation8 + $0x34] sm:$0xf]
    %v431 = vld [vmem:[#allocation8 + $0x38] sm:$0xf]
    %v432 = vld [vmem:[#allocation8 + $0x3c] sm:$0xf]
    %v433 = vld [vmem:[#allocation8 + $0x40] sm:$0xf]
    %v434 = vld [vmem:[#allocation8 + $0x44] sm:$0xf]
    %v435 = vld [vmem:[#allocation8 + $0x48] sm:$0xf]
    %v436 = vld [vmem:[#allocation8 + $0x4c] sm:$0xf]
    %v437 = vld [vmem:[#allocation8 + $0x50] sm:$0xf]
    %v438 = vld [vmem:[#allocation8 + $0x54] sm:$0xf]
    %v439 = vld [vmem:[#allocation8 + $0x58] sm:$0xf]
    %v440 = vld [vmem:[#allocation8 + $0x5c] sm:$0xf]
    %v441 = vld [vmem:[#allocation8 + $0x60] sm:$0xf]
    %v442 = vld [vmem:[#allocation8 + $0x64] sm:$0xf]
    %v443 = vld [vmem:[#allocation8 + $0x68] sm:$0xf]
    %v444 = vld [vmem:[#allocation8 + $0x6c] sm:$0xf]
    %v445 = vld [vmem:[#allocation8 + $0x70] sm:$0xf]
    %v446 = vld [vmem:[#allocation8 + $0x74] sm:$0xf]
    %v447 = vld [vmem:[#allocation8 + $0x78] sm:$0xf]
    %v448 = vld [vmem:[#allocation8 + $0x7c] sm:$0xf]
    %v449 = vld [vmem:[%s6] sm:$0x1]
    %v451 = vlaneseq
    %v452 = vshrl.u32 %v451, 7
    %v453 = vsub.s32 0, %v452
    %v454 = vrot.slane %v449, %v453
    %v488 = vunpack.c.l.b16 %v417
    %v489 = vunpack.c.l.b16 %v418
    %v490 = vunpack.c.l.b16 %v419
    %v491 = vunpack.c.l.b16 %v420
    %v492 = vunpack.c.l.b16 %v421
    %v493 = vunpack.c.l.b16 %v422
    %v494 = vunpack.c.l.b16 %v423
    %v495 = vunpack.c.l.b16 %v424
    %v496 = vunpack.c.l.b16 %v425
    %v497 = vunpack.c.l.b16 %v426
    %v498 = vunpack.c.l.b16 %v427
    %v499 = vunpack.c.l.b16 %v428
    %v500 = vunpack.c.l.b16 %v429
    %v501 = vunpack.c.l.b16 %v430
    %v502 = vunpack.c.l.b16 %v431
    %v503 = vunpack.c.l.b16 %v432
    %v504 = vunpack.c.l.b16 %v433
    %v505 = vunpack.c.l.b16 %v434
    %v506 = vunpack.c.l.b16 %v435
    %v507 = vunpack.c.l.b16 %v436
    %v508 = vunpack.c.l.b16 %v437
    %v509 = vunpack.c.l.b16 %v438
    %v510 = vunpack.c.l.b16 %v439
    %v511 = vunpack.c.l.b16 %v440
    %v512 = vunpack.c.l.b16 %v441
    %v513 = vunpack.c.l.b16 %v442
    %v514 = vunpack.c.l.b16 %v443
    %v515 = vunpack.c.l.b16 %v444
    %v516 = vunpack.c.l.b16 %v445
    %v517 = vunpack.c.l.b16 %v446
    %v518 = vunpack.c.l.b16 %v447
    %v519 = vunpack.c.l.b16 %v448
    %v520 = vpack.c.b16 %v489, %v488
    %v521 = vpack.c.b16 %v491, %v490
    %v522 = vpack.c.b16 %v493, %v492
    %v523 = vpack.c.b16 %v495, %v494
    %v524 = vpack.c.b16 %v497, %v496
    %v525 = vpack.c.b16 %v499, %v498
    %v526 = vpack.c.b16 %v501, %v500
    %v527 = vpack.c.b16 %v503, %v502
    %v528 = vpack.c.b16 %v505, %v504
    %v529 = vpack.c.b16 %v507, %v506
    %v530 = vpack.c.b16 %v509, %v508
    %v531 = vpack.c.b16 %v511, %v510
    %v532 = vpack.c.b16 %v513, %v512
    %v533 = vpack.c.b16 %v515, %v514
    %v534 = vpack.c.b16 %v517, %v516
    %v535 = vpack.c.b16 %v519, %v518
    %552 = vmatprep.subr.bf16.mxu0 0
    %553 = vmatpush1.bf16.msra.mxu0 %v527
    %554 = vmatprep.subr.bf16.mxu0 0
    %555 = vmatpush1.bf16.msra.mxu0 %v526
    %556 = vmatprep.subr.bf16.mxu0 0
    %557 = vmatpush1.bf16.msra.mxu0 %v525
    %558 = vmatprep.subr.bf16.mxu0 0
    %559 = vmatpush1.bf16.msra.mxu0 %v524
    %560 = vmatprep.subr.bf16.mxu0 0
    %561 = vmatpush1.bf16.msra.mxu0 %v523
    %562 = vmatprep.subr.bf16.mxu0 0
    %563 = vmatpush1.bf16.msra.mxu0 %v522
    %564 = vmatprep.subr.bf16.mxu0 0
    %565 = vmatpush1.bf16.msra.mxu0 %v521
    %566 = vmatprep.subr.bf16.mxu0 0
    %567 = vmatpush1.bf16.msra.mxu0 %v520
    %568 = vmatprep.subr.bf16.mxu0 0
    %569 = vmatpush2.bf16.msra.mxu0 %v535
    %570 = vmatprep.subr.bf16.mxu0 0
    %571 = vmatpush2.bf16.msra.mxu0 %v534
    %572 = vmatprep.subr.bf16.mxu0 0
    %573 = vmatpush2.bf16.msra.mxu0 %v533
    %574 = vmatprep.subr.bf16.mxu0 0
    %575 = vmatpush2.bf16.msra.mxu0 %v532
    %576 = vmatprep.subr.bf16.mxu0 0
    %577 = vmatpush2.bf16.msra.mxu0 %v531
    %578 = vmatprep.subr.bf16.mxu0 0
    %579 = vmatpush2.bf16.msra.mxu0 %v530
    %580 = vmatprep.subr.bf16.mxu0 0
    %581 = vmatpush2.bf16.msra.mxu0 %v529
    %582 = vmatprep.subr.bf16.mxu0 0
    %583 = vmatpush2.bf16.msra.mxu0 %v528
    %584 = vmatprep.mubr.bf16.mxu0 %v416
    %585 = vmatmul.mubr.bf16.gmra.mxu0 %v415
    %v586 = vpop.f32.mrf.mxu0
    %v587 = vadd.f32 %v454, %v586
    %v588 = vpop.f32.mrf.mxu0
    %v589 = vpop.f32.mrf.mxu0
    %v590 = vpop.f32.mrf.mxu0
    %591 = vdwg.mxu0
    %v592 = vlaneseq
    %v593 = vand.u32 %v592, 127
    %vm594 = vcmp.eq.s32.totalorder %v593, 4
    %v595 = vxor.u32 %v587, 2147483648
    %v596 = vmul.f32 %v595, 1.442695
    %v597 = vpow.pop %v596
    %v598 = vadd.f32 %v597, 1.0
    %v599 = vrcp.pop %v598
    %v600 = vmul.f32 1.0, %v599
    %v601 = vsel %vm594, %v600, %v587
    %vm602 = vcmask 72704
    %603 = vst.msk [vmem:[#allocation10] sm:$0xff] %vm602, %v601
    // Predicated region
    $region46: #{tpu_custom_call.1} parent=1 // pred_check
      _
    $region47: #{tpu_custom_call.1} parent=1 // pred_check_branch
      %605 = sbr.rel (0) target = $region49
    $region48: #{tpu_custom_call.1} parent=1 // pred_region
      %s607 = ssub.s32 128, 128
      %608 = vsyncadd [#allocation4], %s607
      %s610 = sshll.u32 [#allocation10], 4
      %s611 = int_to_ptr.vmem [resolvable:$true] %s610
      %613 = dma.vmem_to_hbm [thread:$0]  %s611, 128, %s7, [#allocation4]
    $region49: #{tpu_custom_call.1} parent=1 // pred_fallthru
      _
    // Predicated region
    $region50: #{tpu_custom_call.1} parent=1 // pred_check
      _
    $region51: #{tpu_custom_call.1} parent=1 // pred_check_branch
      %615 = sbr.rel (0) target = $region53
    $region52: #{tpu_custom_call.1} parent=1 // pred_region
      %616 = dma.done [#allocation4], 128
    $region53: #{tpu_custom_call.1} parent=1 // pred_fallthru
      _
    %617 = vsyncpa [#allocation3], 1
    %618 = vsyncpa [#allocation6], 1
    %619 = vsyncpa [#allocation9], 1
    %620 = vsyncpa [#allocation4], 1

</llo_original>
